<compile_context>
chip_gen: v5e
topology: v5e:2x2
jax: 0.10.0
libtpu: 0.0.40
codegen_flags: <defaults>
</compile_context>

<pallas_src>
import math
import functools

import jax
import jax.numpy as jnp
from jax import lax
from jax.experimental import pallas as pl
from jax.experimental.pallas import tpu as pltpu


def _attention_kernel(data_ref, wqk_ref, bqk_ref, mask_ref, out_ref, *,
                      tb, seq, dim, lane_dense):
    x = data_ref[...]                                      # (tb*S, D) packed tokens, f32

    # Fused Q/K projection: one MXU matmul with 2D output columns instead of two
    # D-column matmuls. Q columns are pre-scaled by 1/sqrt(d_k) via the folded
    # weights/bias, so no per-score scale is needed later.
    qk = jnp.dot(x, wqk_ref[...], preferred_element_type=jnp.float32) + bqk_ref[...]
    q = qk[:, :dim]                                        # (tb*S, D), already scaled
    k = qk[:, dim:]                                        # (tb*S, D)

    # Regroup tokens per batch element ((tb*S) % 8 == 0 keeps this a cheap
    # sublane-axis split).
    q3 = q.reshape(tb, seq, dim)
    k3 = k.reshape(tb, seq, dim)
    x3 = x.reshape(tb, seq, dim)

    # scores[b] = q[b] @ k[b].T — contract the last dims directly (batched over
    # tb) so no transposed copy of k is materialized.
    scores = lax.dot_general(
        q3, k3, dimension_numbers=(((2,), (2,)), ((0,), (0,))),
        preferred_element_type=jnp.float32)                # (tb, S, S)

    # Exact masked_fill(mask == 0, -1e9): key mask broadcast over the query axis
    # (fully-masked rows become uniform after softmax, matching PyTorch).
    # The mask ref holds the full (B, S) array (grid-invariant block), so tb is
    # not constrained by the sublane rule — slice this step's rows here.
    row0 = pl.multiple_of(pl.program_id(0) * tb, tb)
    m = mask_ref[pl.ds(row0, tb), :]                       # (tb, S) int32 keep flags
    scores = jnp.where(m[:, None, :] == 0, jnp.float32(-1e9), scores)

    # Numerically-stable softmax over keys, all f32. Exact division (the approx
    # EUP reciprocal used previously broke 1e-3 parity with the reference).
    smax = jnp.max(scores, axis=-1, keepdims=True)
    e = jnp.exp(scores - smax)
    probs = e / jnp.sum(e, axis=-1, keepdims=True)         # (tb, S, S)

    # output = probs @ data (values are the unchanged input), batched over tb.
    out = lax.dot_general(
        probs, x3, dimension_numbers=(((2,), (1,)), ((0,), (0,))),
        preferred_element_type=jnp.float32)                # (tb, S, D)

    if lane_dense:
        # Lane-dense store: out_ref block is (1, tb*S*D/128, 128); the in-kernel
        # reshape is a relayout but the writeback becomes unmasked full-lane vst.
        out_ref[...] = out.reshape(out_ref.shape).astype(out_ref.dtype)
    else:
        out_ref[...] = out.reshape(tb * seq, dim).astype(out_ref.dtype)


def _pick_tb(batch, seq, dim, *, budget_bytes=12 << 20, max_rows=1024):
    """Pick how many batch elements to pack per grid step.

    Selection order:
      1. legality: tb divides B and (tb*S) % 8 == 0 (sublane rule for the packed
         slab); tb == B is always legal (block == full array);
      2. per-step live VMEM under `budget_bytes` — conservative against the
         scoped-VMEM defaults (16 MiB v5e, 32 MiB v6e/v7x) so one sizing is safe
         on every generation and the old whole-batch VMEM blowup cannot happen;
      3. keep grid >= 2 steps whenever B >= 2 so the "parallel" axis can be
         megacore-sharded (v7x has 2 TensorCores; a 1-step grid idles one);
      4. within the above, pack as many tokens as possible (measured tiling
         curve: bigger tiles amortize the ~0.35us/step overhead), up to max_rows.
    """
    def step_bytes(tb):
        rows = tb * seq
        slab = rows * dim * 4                      # one f32 token slab
        return (2 * slab                           # double-buffered input slab
                + 2 * slab                         # double-buffered output slab
                + rows * 2 * dim * 4               # fused qk projection
                + 3 * tb * seq * seq * 4           # scores / exp / probs
                + slab)                            # f32 output before store

    legal = [t for t in range(1, batch + 1)
             if batch % t == 0 and ((t * seq) % 8 == 0 or t == batch)]
    fitting = [t for t in legal if step_bytes(t) <= budget_bytes]
    pool = fitting if fitting else [legal[0]]      # nothing fits: smallest legal tile
    multi = [t for t in pool if batch // t >= 2]
    if multi:
        pool = multi
    # Largest packed-token count, capped at max_rows (beyond it, prefer smaller).
    return max(pool, key=lambda t: (min(t * seq, max_rows), -t * seq))


def unchanged_value_attention(data, mask, wq, bq, wk, bk):
    """data: (B, S, D) f32; mask: (B, S) key mask (0 => masked); wq/bq/wk/bk torch layout."""
    B, S, D = data.shape
    tb = _pick_tb(B, S, D)
    grid_b = B // tb
    rows = tb * S
    scale = 1.0 / math.sqrt(D)

    # Fold the 1/sqrt(d_k) scale into the Q projection (exact) and fuse the Q/K
    # weights/biases into single (D, 2D) / (1, 2D) operands.
    wqk = jnp.concatenate([wq.T * scale, wk.T], axis=1).astype(jnp.float32)       # (D, 2D)
    bqk = jnp.concatenate([bq * scale, bk]).reshape(1, 2 * D).astype(jnp.float32) # (1, 2D)

    # Exact masked_fill(mask == 0) semantics, robust to arbitrary float masks.
    mask_keep = (mask != 0).astype(jnp.int32)              # (B, S)

    data_2d = data.reshape(B * S, D)                       # tokens on the sublane/M axis

    # Lane-dense output path: only when D < 128, the slab flattens evenly into
    # 128-wide rows, and each step writes at least one full (8,128) tile — below
    # that the relayout outweighs the masked-store savings (off at toy shapes).
    lane_rows = (rows * D) // 128
    lane_dense = (D % 128 != 0) and ((rows * D) % 128 == 0) and lane_rows >= 8

    if lane_dense:
        out_shape = jax.ShapeDtypeStruct((grid_b, lane_rows, 128), jnp.float32)
        out_spec = pl.BlockSpec((1, lane_rows, 128), lambda b: (b, 0, 0))
    else:
        out_shape = jax.ShapeDtypeStruct((B * S, D), jnp.float32)
        out_spec = pl.BlockSpec((rows, D), lambda b: (b, 0))

    kernel = functools.partial(_attention_kernel, tb=tb, seq=S, dim=D,
                               lane_dense=lane_dense)

    out_raw = pl.pallas_call(
        kernel,
        out_shape=out_shape,
        grid_spec=pltpu.PrefetchScalarGridSpec(
            num_scalar_prefetch=0,
            grid=(grid_b,),
            in_specs=[
                pl.BlockSpec((rows, D), lambda b: (b, 0)),     # packed token slab
                pl.BlockSpec((D, 2 * D), lambda b: (0, 0)),    # fused [WQ^T*s | WK^T]
                pl.BlockSpec((1, 2 * D), lambda b: (0, 0)),    # fused [bq*s | bk]
                pl.BlockSpec((B, S), lambda b: (0, 0)),        # full key mask (grid-invariant)
            ],
            out_specs=out_spec,
        ),
        compiler_params=pltpu.CompilerParams(
            dimension_semantics=("parallel",),
            vmem_limit_bytes=32 * 1024 * 1024),
    )(data_2d, wqk, bqk, mask_keep)

    return out_raw.reshape(B, S, D)


def _reference(data, mask, wq, bq, wk, bk):
    D = data.shape[-1]
    q = jnp.einsum("bsd,ed->bse", data, wq) + bq
    k = jnp.einsum("bsd,ed->bse", data, wk) + bk
    scores = jnp.einsum("bqd,bkd->bqk", q, k) / math.sqrt(D)
    scores = jnp.where(mask[:, None, :] == 0, -1e9, scores)
    probs = jax.nn.softmax(scores, axis=-1)
    return jnp.einsum("bqk,bkd->bqd", probs, data)


if __name__ == "__main__":
    B, S, D = 2, 8, 32   # batch, seq, input_dim

    key = jax.random.PRNGKey(0)
    k_data, k_wq, k_bq, k_wk, k_bk, k_mask = jax.random.split(key, 6)

    data = jax.random.normal(k_data, (B, S, D), dtype=jnp.float32)

    # Deterministic nn.Linear-style init: U(-1/sqrt(D), 1/sqrt(D))
    bound = 1.0 / math.sqrt(D)
    wq = jax.random.uniform(k_wq, (D, D), jnp.float32, -bound, bound)
    bq = jax.random.uniform(k_bq, (D,), jnp.float32, -bound, bound)
    wk = jax.random.uniform(k_wk, (D, D), jnp.float32, -bound, bound)
    bk = jax.random.uniform(k_bk, (D,), jnp.float32, -bound, bound)

    # Binary key mask (B, S): 0 => masked out, 1 => attend.
    mask = (jax.random.uniform(k_mask, (B, S)) > 0.3).astype(jnp.float32)
    # Ensure at least one unmasked key per batch so softmax is well-defined.
    mask = mask.at[:, 0].set(1.0)

    out = unchanged_value_attention(data, mask, wq, bq, wk, bk)
    out = jax.block_until_ready(out)

    ref = _reference(data, mask, wq, bq, wk, bk)
    assert out.shape == (B, S, D)
    # Exact-division softmax: kernel matches the f32 reference to float rounding.
    assert jnp.allclose(out, ref, atol=1e-4, rtol=1e-4), "mismatch vs JAX reference"

    print("KERNEL_OK")
</pallas_src>

<mosaic_0001>
module attributes {stable_mosaic.version = 11 : i64} {
  func.func @_attention_kernel(%arg0: i32, %arg1: memref<8x32xf32, #tpu.memory_space<vmem>>, %arg2: memref<32x64xf32, #tpu.memory_space<vmem>>, %arg3: memref<1x64xf32, #tpu.memory_space<vmem>>, %arg4: memref<2x8xi32, #tpu.memory_space<vmem>>, %arg5: memref<8x32xf32, #tpu.memory_space<vmem>>) attributes {dimension_semantics = [#tpu.dimension_semantics<parallel>], iteration_bounds = array<i64: 2>, scalar_prefetch = 0 : i64, scratch_operands = 0 : i64, tpu.core_type = #tpu.core_type<tc>, window_params = [{transform_indices = @transform_0, window_bounds = array<i64: 8, 32>}, {pipeline_mode = #tpu.pipeline_mode<synchronous>, transform_indices = @transform_1, window_bounds = array<i64: 32, 64>}, {pipeline_mode = #tpu.pipeline_mode<synchronous>, transform_indices = @transform_2, window_bounds = array<i64: 1, 64>}, {pipeline_mode = #tpu.pipeline_mode<synchronous>, transform_indices = @transform_3, window_bounds = array<i64: 2, 8>}, {transform_indices = @transform_4, window_bounds = array<i64: 8, 32>}]} {
    %c0 = arith.constant 0 : index
    %c0_0 = arith.constant 0 : index
    %0 = vector.load %arg1[%c0, %c0_0] : memref<8x32xf32, #tpu.memory_space<vmem>>, vector<8x32xf32>
    %c0_1 = arith.constant 0 : index
    %c0_2 = arith.constant 0 : index
    %1 = vector.load %arg2[%c0_1, %c0_2] : memref<32x64xf32, #tpu.memory_space<vmem>>, vector<32x64xf32>
    %cst = arith.constant dense<0.000000e+00> : vector<8x64xf32>
    %2 = tpu.matmul %0, %1, %cst {dimension_numbers = #tpu.dot_dimension_numbers<[1], [0], [0], [1], [0, 0, 1, 1], [], []>} : vector<8x32xf32>, vector<32x64xf32>, vector<8x64xf32> -> vector<8x64xf32>
    %c0_3 = arith.constant 0 : index
    %c0_4 = arith.constant 0 : index
    %3 = vector.load %arg3[%c0_3, %c0_4] : memref<1x64xf32, #tpu.memory_space<vmem>>, vector<1x64xf32>
    %4 = vector.broadcast %3 : vector<1x64xf32> to vector<8x64xf32>
    %5 = arith.addf %2, %4 : vector<8x64xf32>
    %6 = vector.extract_strided_slice %5 {offsets = [0, 0], sizes = [8, 32], strides = [1, 1]} : vector<8x64xf32> to vector<8x32xf32>
    %7 = vector.extract_strided_slice %5 {offsets = [0, 32], sizes = [8, 32], strides = [1, 1]} : vector<8x64xf32> to vector<8x32xf32>
    %8 = vector.shape_cast %6 : vector<8x32xf32> to vector<1x8x32xf32>
    %9 = vector.shape_cast %7 : vector<8x32xf32> to vector<1x8x32xf32>
    %10 = vector.shape_cast %0 : vector<8x32xf32> to vector<1x8x32xf32>
    %cst_5 = arith.constant dense<0.000000e+00> : vector<1x8x8xf32>
    %11 = tpu.matmul %8, %9, %cst_5 {dimension_numbers = #tpu.dot_dimension_numbers<[2], [2], [1], [1], [0, 0, 0, 1, 1, 1], [0], [0]>} : vector<1x8x32xf32>, vector<1x8x32xf32>, vector<1x8x8xf32> -> vector<1x8x8xf32>
    %c1_i32 = arith.constant 1 : i32
    %12 = arith.muli %arg0, %c1_i32 : i32
    %13 = tpu.assume_multiple %12, 1 : i32
    %14 = arith.index_cast %13 : i32 to index
    %c0_6 = arith.constant 0 : index
    %15 = vector.load %arg4[%14, %c0_6] : memref<2x8xi32, #tpu.memory_space<vmem>>, vector<1x8xi32>
    %16 = vector.shape_cast %15 : vector<1x8xi32> to vector<1x1x8xi32>
    %c0_i32 = arith.constant 0 : i32
    %17 = vector.broadcast %c0_i32 : i32 to vector<1x1x8xi32>
    %18 = arith.cmpi eq, %16, %17 : vector<1x1x8xi32>
    %cst_7 = arith.constant -1.000000e+09 : f32
    %19 = vector.shape_cast %18 : vector<1x1x8xi1> to vector<1x1x8xi1>
    %20 = vector.broadcast %19 : vector<1x1x8xi1> to vector<1x8x8xi1>
    %21 = vector.broadcast %cst_7 : f32 to vector<1x8x8xf32>
    %22 = arith.select %20, %21, %11 : vector<1x8x8xi1>, vector<1x8x8xf32>
    %cst_8 = arith.constant dense<0xFF800000> : vector<1x8xf32>
    %23 = vector.multi_reduction <maximumf>, %22, %cst_8 [2] : vector<1x8x8xf32> to vector<1x8xf32>
    %24 = vector.shape_cast %23 : vector<1x8xf32> to vector<1x8x1xf32>
    %25 = vector.broadcast %24 : vector<1x8x1xf32> to vector<1x8x8xf32>
    %26 = arith.subf %22, %25 : vector<1x8x8xf32>
    %27 = math.exp %26 : vector<1x8x8xf32>
    %cst_9 = arith.constant dense<0.000000e+00> : vector<1x8xf32>
    %28 = vector.multi_reduction <add>, %27, %cst_9 [2] : vector<1x8x8xf32> to vector<1x8xf32>
    %29 = vector.shape_cast %28 : vector<1x8xf32> to vector<1x8x1xf32>
    %30 = vector.broadcast %29 : vector<1x8x1xf32> to vector<1x8x8xf32>
    %31 = arith.divf %27, %30 : vector<1x8x8xf32>
    %cst_10 = arith.constant dense<0.000000e+00> : vector<1x8x32xf32>
    %32 = tpu.matmul %31, %10, %cst_10 {dimension_numbers = #tpu.dot_dimension_numbers<[2], [1], [1], [2], [0, 0, 0, 1, 1, 2], [0], [0]>} : vector<1x8x8xf32>, vector<1x8x32xf32>, vector<1x8x32xf32> -> vector<1x8x32xf32>
    %33 = vector.shape_cast %32 : vector<1x8x32xf32> to vector<8x32xf32>
    %c0_11 = arith.constant 0 : index
    %c0_12 = arith.constant 0 : index
    %34 = vector.load %arg5[%c0_11, %c0_12] : memref<8x32xf32, #tpu.memory_space<vmem>>, vector<8x32xf32>
    tpu.vector_store %arg5[%c0_11, %c0_12], %33 {strides = array<i32>} : memref<8x32xf32, #tpu.memory_space<vmem>>, vector<8x32xf32>,
    return
  }
  func.func @transform_0(%arg0: i32) -> (i32, i32) {
    %c0_i32 = arith.constant 0 : i32
    %c0_i32_0 = arith.constant 0 : i32
    return %arg0, %c0_i32 : i32, i32
  }
  func.func @transform_1(%arg0: i32) -> (i32, i32) {
    %c0_i32 = arith.constant 0 : i32
    %c0_i32_0 = arith.constant 0 : i32
    %c0_i32_1 = arith.constant 0 : i32
    return %c0_i32, %c0_i32_0 : i32, i32
  }
  func.func @transform_2(%arg0: i32) -> (i32, i32) {
    %c0_i32 = arith.constant 0 : i32
    %c0_i32_0 = arith.constant 0 : i32
    %c0_i32_1 = arith.constant 0 : i32
    return %c0_i32, %c0_i32_0 : i32, i32
  }
  func.func @transform_3(%arg0: i32) -> (i32, i32) {
    %c0_i32 = arith.constant 0 : i32
    %c0_i32_0 = arith.constant 0 : i32
    %c0_i32_1 = arith.constant 0 : i32
    return %c0_i32, %c0_i32_0 : i32, i32
  }
  func.func @transform_4(%arg0: i32) -> (i32, i32) {
    %c0_i32 = arith.constant 0 : i32
    %c0_i32_0 = arith.constant 0 : i32
    return %arg0, %c0_i32 : i32, i32
  }
}

</mosaic_0001>

<llo_original>
// kernel: tpu_custom_call.1
$region0: #{tpu_custom_call.1}
  #allocation0 [shape = 'u32[]', space=smem, size = 0x4, offset = 0x4, fixed_abs, tag = 'smem constant byte address 0x4 - core index']
  #allocation1 [shape = 'u32[72,128]{1,0:T(1,128)}', space=vmem, size = 0x9000, scoped, tag = 'internal scratch']
  %s0 = inlined_call_operand.hbm [shape: f32[16,32], index: 0, kind: input, shape index: {}]
  %s1 = inlined_call_operand.hbm [shape: f32[32,64], index: 1, kind: input, shape index: {}]
  %s2 = inlined_call_operand.hbm [shape: f32[1,64], index: 2, kind: input, shape index: {}]
  %s3 = inlined_call_operand.vmem [shape: s32[2,8], index: 3, kind: input, shape index: {}]
  %s4 = inlined_call_operand.hbm [shape: f32[16,32], index: 4, kind: output, shape index: {}]
  %s5 = sld [smem:[#allocation0]]
  $region61: #{tpu_custom_call.1} parent=0
    _
  %s7 = ssub.s32 1, %s5
  %s8 = scalar_select 0, %s7, %s5
  $region1: #{tpu_custom_call.1} parent=0
    #allocation2 [shape = 'u8[8192]{0}', space=vmem, size = 0x2000, scoped, tag = 'input window, operand 0']
    #allocation3 [shape = 's32[2]{0}', space=sflag, size = 0x8, scoped, tag = 'scoped memory for tpu_custom_call.1']
    #allocation4 [shape = 's32[2]{0}', space=sflag, size = 0x8, scoped, tag = 'scoped memory for tpu_custom_call.1']
    #allocation5 [shape = 'u8[16384]{0}', space=vmem, size = 0x4000, scoped, tag = 'input window, operand 1, single buffered']
    #allocation6 [shape = 's32[1]{0}', space=sflag, size = 0x4, scoped, tag = 'scoped memory for tpu_custom_call.1']
    #allocation7 [shape = 'u8[512]{0}', space=vmem, size = 0x400, scoped, tag = 'input window, operand 2, single buffered']
    #allocation8 [shape = 'u8[8192]{0}', space=vmem, size = 0x2000, scoped, tag = 'output window, operand 0']
    %9 = vsyncpa [#allocation3], 0
    %s10 = scalar_lea.sflag [#allocation3], 1
    %11 = vsyncpa %s10, 0
    %12 = vsyncpa [#allocation6], 0
    %13 = vsyncpa [#allocation4], 0
    %s14 = scalar_lea.sflag [#allocation4], 1
    %15 = vsyncpa %s14, 0
    loop: start=0, step=1, limit=4
    $region2: #{tpu_custom_call.1} parent=1 // loop_pre_header
      _
    $region3: #{tpu_custom_call.1} parent=1 // loop_header
      %s17 = sphi 0, %s21
      %p18 = scmp.ge.s32.totalorder %s17, 4
      %s27 = sphi 0, %s29
      %s30 = sphi 0, %s27
      %s31 = sphi 0, %s30
      %s47 = sphi 0, %s31
      %s51 = sphi 0, %s51
      %s53 = sphi 0, %s51
      %s54 = sphi 0, %s53
      %s68 = sphi 0, %s54
      %s72 = sphi 0, %s72
      %s74 = sphi 0, %s72
      %s75 = sphi 0, %s74
      %s89 = sphi 0, %s75
      %s93 = sphi 0, %s93
      %s95 = sphi 0, %s93
      %s96 = sphi 0, %s95
      %s110 = sphi 0, %s96
      %s116 = sphi 0, %s118
      %s119 = sphi 0, %s116
      %s120 = sphi 0, %s119
      %s136 = sphi 0, %s120
    $region4: #{tpu_custom_call.1} parent=1 // loop_header_branch
      %20 = sbr.rel (%p18) target = $region8
    $region5: #{tpu_custom_call.1} parent=1 // loop_body
      %s22 = ssub.s32 %s17, 1
      %s23 = ssub.s32 %s17, 2
      %s24 = sadd.s32 %s17, 1
      %s25 = ssub.s32 %s17, %s24
      %p26 = scmp.eq.s32.totalorder %s25, 0
      %s28 = sadd.s32 %s27, 1
      %s29 = scalar_select %p26, %s27, %s28
      %p32 = pneg %p26
      %p33 = scmp.eq.s32.totalorder %s17, 1
      %p34 = por %p32, %p33
      %p35 = scmp.ne.s32.totalorder %s27, %s30
      %p36 = scmp.eq.s32.totalorder %s17, 0
      %p37 = por %p35, %p36
      %p38 = scmp.ne.s32.totalorder %s27, %s30
      %p39 = scmp.eq.s32.totalorder %s22, 1
      %p40 = por %p38, %p39
      %p41 = scmp.ne.s32.totalorder %s30, %s31
      %p42 = scmp.eq.s32.totalorder %s22, 0
      %p43 = por %p41, %p42
      %p44 = scmp.ne.s32.totalorder %s30, %s31
      %p45 = scmp.eq.s32.totalorder %s23, 1
      %p46 = por %p44, %p45
      %p48 = scmp.ne.s32.totalorder %s31, %s47
      %p49 = scmp.eq.s32.totalorder %s23, 0
      %p50 = por %p48, %p49
      %s52 = sadd.s32 %s51, 1
      %p55 = scmp.eq.s32.totalorder %s17, 1
      %p56 = scmp.ne.s32.totalorder %s51, %s53
      %p57 = scmp.eq.s32.totalorder %s17, 0
      %p58 = por %p56, %p57
      %p59 = scmp.ne.s32.totalorder %s51, %s53
      %p60 = scmp.eq.s32.totalorder %s22, 1
      %p61 = por %p59, %p60
      %p62 = scmp.ne.s32.totalorder %s53, %s54
      %p63 = scmp.eq.s32.totalorder %s22, 0
      %p64 = por %p62, %p63
      %p65 = scmp.ne.s32.totalorder %s53, %s54
      %p66 = scmp.eq.s32.totalorder %s23, 1
      %p67 = por %p65, %p66
      %p69 = scmp.ne.s32.totalorder %s54, %s68
      %p70 = scmp.eq.s32.totalorder %s23, 0
      %p71 = por %p69, %p70
      %s73 = sadd.s32 %s72, 1
      %p76 = scmp.eq.s32.totalorder %s17, 1
      %p77 = scmp.ne.s32.totalorder %s72, %s74
      %p78 = scmp.eq.s32.totalorder %s17, 0
      %p79 = por %p77, %p78
      %p80 = scmp.ne.s32.totalorder %s72, %s74
      %p81 = scmp.eq.s32.totalorder %s22, 1
      %p82 = por %p80, %p81
      %p83 = scmp.ne.s32.totalorder %s74, %s75
      %p84 = scmp.eq.s32.totalorder %s22, 0
      %p85 = por %p83, %p84
      %p86 = scmp.ne.s32.totalorder %s74, %s75
      %p87 = scmp.eq.s32.totalorder %s23, 1
      %p88 = por %p86, %p87
      %p90 = scmp.ne.s32.totalorder %s75, %s89
      %p91 = scmp.eq.s32.totalorder %s23, 0
      %p92 = por %p90, %p91
      %s94 = sadd.s32 %s93, 1
      %p97 = scmp.eq.s32.totalorder %s17, 1
      %p98 = scmp.ne.s32.totalorder %s93, %s95
      %p99 = scmp.eq.s32.totalorder %s17, 0
      %p100 = por %p98, %p99
      %p101 = scmp.ne.s32.totalorder %s93, %s95
      %p102 = scmp.eq.s32.totalorder %s22, 1
      %p103 = por %p101, %p102
      %p104 = scmp.ne.s32.totalorder %s95, %s96
      %p105 = scmp.eq.s32.totalorder %s22, 0
      %p106 = por %p104, %p105
      %p107 = scmp.ne.s32.totalorder %s95, %s96
      %p108 = scmp.eq.s32.totalorder %s23, 1
      %p109 = por %p107, %p108
      %p111 = scmp.ne.s32.totalorder %s96, %s110
      %p112 = scmp.eq.s32.totalorder %s23, 0
      %p113 = por %p111, %p112
      %s114 = ssub.s32 %s17, %s24
      %p115 = scmp.eq.s32.totalorder %s114, 0
      %s117 = sadd.s32 %s116, 1
      %s118 = scalar_select %p115, %s116, %s117
      %p121 = pneg %p115
      %p122 = scmp.eq.s32.totalorder %s17, 1
      %p123 = por %p121, %p122
      %p124 = scmp.ne.s32.totalorder %s116, %s119
      %p125 = scmp.eq.s32.totalorder %s17, 0
      %p126 = por %p124, %p125
      %p127 = scmp.ne.s32.totalorder %s116, %s119
      %p128 = scmp.eq.s32.totalorder %s22, 1
      %p129 = por %p127, %p128
      %p130 = scmp.ne.s32.totalorder %s119, %s120
      %p131 = scmp.eq.s32.totalorder %s22, 0
      %p132 = por %p130, %p131
      %p133 = scmp.ne.s32.totalorder %s119, %s120
      %p134 = scmp.eq.s32.totalorder %s23, 1
      %p135 = por %p133, %p134
      %p137 = scmp.ne.s32.totalorder %s120, %s136
      %p138 = scmp.eq.s32.totalorder %s23, 0
      %p139 = por %p137, %p138
      %p140 = scmp.le.s32.totalorder 1, %s17
      %p141 = scmp.lt.s32.totalorder %s17, 3
      %p142 = pnand %p140, %p141
      %p143 = pneg %p142
      // Predicated region
      $region9: #{tpu_custom_call.1} parent=5 // pred_check
        _
      $region10: #{tpu_custom_call.1} parent=5 // pred_check_branch
        %145 = sbr.rel (%p142) target = $region12
      $region11: #{tpu_custom_call.1} parent=5 // pred_region
        %s146 = ssub.s32 %s17, 1
        // Predicated region
        $region13: #{tpu_custom_call.1} parent=11 // pred_check
          %p147 = pneg %p64
        $region14: #{tpu_custom_call.1} parent=11 // pred_check_branch
          %149 = sbr.rel (%p147) target = $region16
        $region15: #{tpu_custom_call.1} parent=11 // pred_region
          %151 = vsyncadd [#allocation6], 0
          %s152 = sshll.u32 %s1, 4
          %s153 = int_to_ptr.hbm [resolvable:$true] %s152
          %s154 = sshll.u32 [#allocation5], 4
          %s155 = int_to_ptr.vmem [resolvable:$true] %s154
          %160 = dma.hbm_to_vmem [thread:$0]  %s153, 512, %s155, [#allocation6], 128, 128, 8
        $region16: #{tpu_custom_call.1} parent=11 // pred_fallthru
          _
        // Predicated region
        $region17: #{tpu_custom_call.1} parent=11 // pred_check
          %p161 = pneg %p85
        $region18: #{tpu_custom_call.1} parent=11 // pred_check_branch
          %163 = sbr.rel (%p161) target = $region20
        $region19: #{tpu_custom_call.1} parent=11 // pred_region
          %165 = vsyncadd [#allocation6], 0
          %s167 = sshll.u32 %s2, 4
          %s168 = int_to_ptr.hbm [resolvable:$true] %s167
          %s169 = sshll.u32 [#allocation7], 4
          %s170 = int_to_ptr.vmem [resolvable:$true] %s169
          %172 = dma.hbm_to_vmem [thread:$0]  %s168, 16, %s170, [#allocation6]
        $region20: #{tpu_custom_call.1} parent=11 // pred_fallthru
          _
        // Predicated region
        $region21: #{tpu_custom_call.1} parent=11 // pred_check
          %p173 = pneg %p106
        $region22: #{tpu_custom_call.1} parent=11 // pred_check_branch
          %175 = sbr.rel (%p173) target = $region24
        $region23: #{tpu_custom_call.1} parent=11 // pred_region
          _
        $region24: #{tpu_custom_call.1} parent=11 // pred_fallthru
          _
      $region12: #{tpu_custom_call.1} parent=5 // pred_fallthru
        _
      %p176 = scmp.lt.s32.totalorder %s17, 2
      // Predicated region
      $region25: #{tpu_custom_call.1} parent=5 // pred_check
        %p177 = pneg %p176
      $region26: #{tpu_custom_call.1} parent=5 // pred_check_branch
        %179 = sbr.rel (%p177) target = $region28
      $region27: #{tpu_custom_call.1} parent=5 // pred_region
        // Predicated region
        $region29: #{tpu_custom_call.1} parent=27 // pred_check
          %p180 = pneg %p37
        $region30: #{tpu_custom_call.1} parent=27 // pred_check_branch
          %182 = sbr.rel (%p180) target = $region32
        $region31: #{tpu_custom_call.1} parent=27 // pred_region
          %s183 = sand.u32 %s27, 1
          %s184 = scalar_lea.sflag [#allocation3], %s183
          %s185 = sand.u32 %s27, 1
          %s186 = smul.addr %s185, 8
          %s187 = scalar_lea.vmem [#allocation2], %s186
          %189 = vsyncadd %s184, 0
          %s190 = smul.addr %s17, 8
          %s191 = scalar_lea.hbm %s0, %s190
          %s193 = sshll.u32 %s191, 4
          %s194 = int_to_ptr.hbm [resolvable:$true] %s193
          %s195 = sshll.u32 %s187, 4
          %s196 = int_to_ptr.vmem [resolvable:$true] %s195
          %198 = dma.hbm_to_vmem [thread:$0]  %s194, 128, %s196, %s184
        $region32: #{tpu_custom_call.1} parent=27 // pred_fallthru
          _
      $region28: #{tpu_custom_call.1} parent=5 // pred_fallthru
        _
      %p199 = scmp.le.s32.totalorder 1, %s17
      %p200 = scmp.lt.s32.totalorder %s17, 3
      %p201 = pnand %p199, %p200
      %p202 = pneg %p201
      // Predicated region
      $region33: #{tpu_custom_call.1} parent=5 // pred_check
        _
      $region34: #{tpu_custom_call.1} parent=5 // pred_check_branch
        %204 = sbr.rel (%p201) target = $region36
      $region35: #{tpu_custom_call.1} parent=5 // pred_region
        %s205 = ssub.s32 %s17, 1
        %s206 = sand.u32 %s30, 1
        %s207 = scalar_lea.sflag [#allocation3], %s206
        %s208 = sand.u32 %s30, 1
        %s209 = smul.addr %s208, 8
        %s210 = scalar_lea.vmem [#allocation2], %s209
        // Predicated region
        $region37: #{tpu_custom_call.1} parent=35 // pred_check
          %p211 = pneg %p43
        $region38: #{tpu_custom_call.1} parent=35 // pred_check_branch
          %213 = sbr.rel (%p211) target = $region40
        $region39: #{tpu_custom_call.1} parent=35 // pred_region
          %215 = dma.done %s207, 128
        $region40: #{tpu_custom_call.1} parent=35 // pred_fallthru
          _
        // Predicated region
        $region41: #{tpu_custom_call.1} parent=35 // pred_check
          %p216 = pneg %p64
        $region42: #{tpu_custom_call.1} parent=35 // pred_check_branch
          %218 = sbr.rel (%p216) target = $region44
        $region43: #{tpu_custom_call.1} parent=35 // pred_region
          %220 = dma.done [#allocation6], 512
        $region44: #{tpu_custom_call.1} parent=35 // pred_fallthru
          _
        // Predicated region
        $region45: #{tpu_custom_call.1} parent=35 // pred_check
          %p221 = pneg %p85
        $region46: #{tpu_custom_call.1} parent=35 // pred_check_branch
          %223 = sbr.rel (%p221) target = $region48
        $region47: #{tpu_custom_call.1} parent=35 // pred_region
          %225 = dma.done [#allocation6], 16
        $region48: #{tpu_custom_call.1} parent=35 // pred_fallthru
          _
        %s226 = sand.u32 %s30, 1
        %s227 = scalar_lea.sflag [#allocation3], %s226
        %s228 = sand.u32 %s30, 1
        %s229 = smul.addr %s228, 8
        %s230 = scalar_lea.vmem [#allocation2], %s229
        %p231 = pneg %p43
        %p232 = pneg %p40
        %p233 = pneg %p64
        %p234 = pneg %p61
        %p235 = pneg %p85
        %p236 = pneg %p82
        %p237 = pneg %p106
        %p238 = pneg %p103
        %p239 = pneg %p132
        %p240 = pneg %p129
        %s241 = sand.u32 %s119, 1
        %s242 = scalar_lea.sflag [#allocation4], %s241
        %s243 = sand.u32 %s119, 1
        %s244 = smul.addr %s243, 8
        %s245 = scalar_lea.vmem [#allocation8], %s244
        %v246 = vld [vmem:[%s210] sm:$0xff]
        %v247 = vld [vmem:[#allocation5] sm:$0xff]
        %v248 = vld [vmem:[#allocation5 + $0x8] sm:$0xff]
        %v249 = vld [vmem:[#allocation5 + $0x10] sm:$0xff]
        %v250 = vld [vmem:[#allocation5 + $0x18] sm:$0xff]
        %v251 = vld [vmem:[#allocation7] sm:$0x1]
        %v253 = vperm.slane %v251, 0
        %vm255 = vcmask 261120
        %v257 = vsel %vm255, %v246, 0
        %259 = vmatpush.msra.mxu0 0.0
        %260 = vmatpush.msra.mxu0 0.0
        %261 = vmatpush.msra.mxu0 0.0
        %262 = vmatpush.msra.mxu0 0.0
        %263 = vmatpush.msra.mxu0 0.0
        %264 = vmatpush.msra.mxu0 0.0
        %265 = vmatpush.msra.mxu0 0.0
        %266 = vmatpush.msra.mxu0 0.0
        %267 = vmatpush.msra.mxu0 0.0
        %268 = vmatpush.msra.mxu0 0.0
        %269 = vmatpush.msra.mxu0 0.0
        %270 = vmatpush.msra.mxu0 0.0
        %271 = vmatpush.msra.mxu0 %v250
        %272 = vmatpush.msra.mxu0 %v249
        %273 = vmatpush.msra.mxu0 %v248
        %274 = vmatpush.msra.mxu0 %v247
        %275 = vmatmul.f32.gmra.mxu0 %v257
        %v276 = vpop.f32.mrf.mxu0
        %v277 = vadd.f32 %v253, %v276
        %278 = vdwg.mxu0
        %280 = vrot.lane.b32.xlu0 %v277, 96
        %v281 = vpop.permute.xlu0 %280
        %v282 = vsel %vm255, %v277, 0
        %v284 = vsel %vm255, %v281, 0
        %286 = vmatpush.xpose.msra.mxu0 0.0
        %287 = vmatpush.xpose.msra.mxu0 0.0
        %288 = vmatpush.xpose.msra.mxu0 0.0
        %289 = vmatpush.xpose.msra.mxu0 0.0
        %290 = vmatpush.xpose.msra.mxu0 0.0
        %291 = vmatpush.xpose.msra.mxu0 0.0
        %292 = vmatpush.xpose.msra.mxu0 0.0
        %293 = vmatpush.xpose.msra.mxu0 0.0
        %294 = vmatpush.xpose.msra.mxu0 0.0
        %295 = vmatpush.xpose.msra.mxu0 0.0
        %296 = vmatpush.xpose.msra.mxu0 0.0
        %297 = vmatpush.xpose.msra.mxu0 0.0
        %298 = vmatpush.xpose.msra.mxu0 0.0
        %299 = vmatpush.xpose.msra.mxu0 0.0
        %300 = vmatpush.xpose.msra.mxu0 0.0
        %301 = vmatpush.xpose.msra.mxu0 %v284
        %302 = vmatmul.f32.gmra.mxu0 %v282
        %v303 = vpop.f32.mrf.mxu0
        %v304 = vadd.f32 0.0, %v303
        %305 = vdwg.mxu0
        %s306 = scalar_lea.vmem %s3, %s22
        %v307 = vld [vmem:[%s306] sm:$0x1]
        %vm308 = vcmp.eq.s32.totalorder %v307, 0
        %v309 = vsel %vm308, 1, 0
        %v310 = vperm.slane %v309, 0
        %vm311 = vcmp.eq.s32.totalorder %v310, 1
        %v312 = vsel %vm311, -1e+09, %v304
        %vm313 = vcmask 64512
        %v314 = vsel %vm313, %v312, -inf
        %315 = vmax.xlane.f32.xlu0 %v314
        %v316 = vpop.xlane.xlu0 %315
        %v317 = vsub.f32 %v312, %v316
        %v318 = vmul.f32 %v317, 1.442695
        %v319 = vpow.pop %v318
        %v320 = vsel %vm313, %v319, 0.0
        %321 = vadd.xlane.f32.xlu0 %v320
        %v322 = vpop.xlane.xlu0 %321
        %v323 = vrcp.pop %v322
        %v324 = vmul.f32 %v322, %v323
        %v325 = vsub.f32 1.0, %v324
        %v326 = vmul.f32 %v323, %v325
        %v327 = vadd.f32 %v323, %v326
        %vm328 = vweird.f32 %v322
        %vm329 = vweird.f32 %v323
        %vm330 = vmor %vm328, %vm329
        %v331 = vsel %vm330, %v323, %v327
        %v332 = vand.u32 2147483647, %v322
        %vm333 = vcmp.eq.f32.partialorder %v332, 8.507059e+37
        %v334 = vand.u32 %v322, 2147483648
        %v335 = vor.u32 1.1754944e-38, %v334
        %v336 = vsel %vm333, %v335, %v331
        %v337 = vmul.f32 %v319, %v336
        %v339 = vsel %vm313, %v337, 0
        %341 = vmatpush.msra.mxu0 0.0
        %342 = vmatpush.msra.mxu0 0.0
        %343 = vmatpush.msra.mxu0 0.0
        %344 = vmatpush.msra.mxu0 0.0
        %345 = vmatpush.msra.mxu0 0.0
        %346 = vmatpush.msra.mxu0 0.0
        %347 = vmatpush.msra.mxu0 0.0
        %348 = vmatpush.msra.mxu0 0.0
        %349 = vmatpush.msra.mxu0 0.0
        %350 = vmatpush.msra.mxu0 0.0
        %351 = vmatpush.msra.mxu0 0.0
        %352 = vmatpush.msra.mxu0 0.0
        %353 = vmatpush.msra.mxu0 0.0
        %354 = vmatpush.msra.mxu0 0.0
        %355 = vmatpush.msra.mxu0 0.0
        %356 = vmatpush.msra.mxu0 %v246
        %357 = vmatmul.f32.gmra.mxu0 %v339
        %v358 = vpop.f32.mrf.mxu0
        %v359 = vadd.f32 0.0, %v358
        %360 = vdwg.mxu0
        %361 = vst.msk [vmem:[%s245] sm:$0xff] %vm255, %v359
        %s362 = sand.u32 %s119, 1
        %s363 = scalar_lea.sflag [#allocation4], %s362
        %s364 = sand.u32 %s119, 1
        %s365 = smul.addr %s364, 8
        %s366 = scalar_lea.vmem [#allocation8], %s365
        // Predicated region
        $region49: #{tpu_custom_call.1} parent=35 // pred_check
          %p367 = pneg %p129
        $region50: #{tpu_custom_call.1} parent=35 // pred_check_branch
          %369 = sbr.rel (%p367) target = $region52
        $region51: #{tpu_custom_call.1} parent=35 // pred_region
          %371 = vsyncadd %s363, 0
          %s372 = smul.addr %s22, 8
          %s373 = scalar_lea.hbm %s4, %s372
          %s375 = sshll.u32 %s366, 4
          %s376 = int_to_ptr.vmem [resolvable:$true] %s375
          %s377 = sshll.u32 %s373, 4
          %s378 = int_to_ptr.hbm [resolvable:$true] %s377
          %380 = dma.vmem_to_hbm [thread:$0]  %s376, 128, %s378, %s363
        $region52: #{tpu_custom_call.1} parent=35 // pred_fallthru
          _
      $region36: #{tpu_custom_call.1} parent=5 // pred_fallthru
        _
      %p381 = scmp.le.s32.totalorder 2, %s17
      // Predicated region
      $region53: #{tpu_custom_call.1} parent=5 // pred_check
        %p382 = pneg %p381
      $region54: #{tpu_custom_call.1} parent=5 // pred_check_branch
        %384 = sbr.rel (%p382) target = $region56
      $region55: #{tpu_custom_call.1} parent=5 // pred_region
        %s385 = ssub.s32 %s17, 2
        // Predicated region
        $region57: #{tpu_custom_call.1} parent=55 // pred_check
          %p386 = pneg %p135
        $region58: #{tpu_custom_call.1} parent=55 // pred_check_branch
          %388 = sbr.rel (%p386) target = $region60
        $region59: #{tpu_custom_call.1} parent=55 // pred_region
          %s389 = sand.u32 %s120, 1
          %s390 = scalar_lea.sflag [#allocation4], %s389
          %s391 = sand.u32 %s120, 1
          %s392 = smul.addr %s391, 8
          %s393 = scalar_lea.vmem [#allocation8], %s392
          %395 = dma.done %s390, 128
        $region60: #{tpu_custom_call.1} parent=55 // pred_fallthru
          _
      $region56: #{tpu_custom_call.1} parent=5 // pred_fallthru
        _
    $region6: #{tpu_custom_call.1} parent=1 // loop_footer
      %s21 = sadd.s32 1, %s17
    $region7: #{tpu_custom_call.1} parent=1 // loop_footer_branch
      %16 = sbr.rel target = $region3
    $region8: #{tpu_custom_call.1} parent=1 // loop_exit
      _
    %396 = vsyncpa [#allocation3], 1
    %s397 = scalar_lea.sflag [#allocation3], 1
    %398 = vsyncpa %s397, 1
    %399 = vsyncpa [#allocation6], 1
    %400 = vsyncpa [#allocation4], 1
    %s401 = scalar_lea.sflag [#allocation4], 1
    %402 = vsyncpa %s401, 1

</llo_original>
